<compile_context>
chip_gen: v5e
topology: v5e:2x2
jax: 0.10.0
libtpu: 0.0.40
codegen_flags: <defaults>
</compile_context>

<pallas_src>
import jax
import jax.numpy as jnp
from jax.experimental import pallas as pl
from jax.experimental.pallas import tpu as pltpu

LANE = 128
SUBLANE = 8
MAX_TM = 2048          # cap on batch-tile rows; keeps VMEM modest for huge M


def _round_up(x: int, m: int) -> int:
    return ((x + m - 1) // m) * m


def _pad2d(x, shape):
    pads = [(0, s - d) for d, s in zip(x.shape, shape)]
    if all(p == (0, 0) for p in pads):
        return x
    return jnp.pad(x, pads)


def _make_ffn_kernel(n_layers: int, compute_dtype):
    """Fused FFN kernel.

    Ref order:
      x                               : (tm, K0) packed/concatenated input tile
      w_0, b_0, ..., w_{L-1}, b_{L-1} : pre-transposed (in, out) weights + (1, out) biases
                                        (hidden layers 128-lane padded; last layer true N)
      o                               : (tm, N) true-N output tile
    """

    def kernel(*refs):
        x_ref = refs[0]
        o_ref = refs[-1]
        wb = refs[1:-1]

        h = x_ref[...]                      # already compute_dtype (cast in wrapper)
        for j in range(n_layers):
            w_ref = wb[2 * j]
            b_ref = wb[2 * j + 1]
            acc = jnp.dot(h, w_ref[...], preferred_element_type=jnp.float32)
            if j < n_layers - 1:
                # Hidden layer: bias-add + ReLU in compute_dtype
                # (bf16 VALU on v6e/v7x; on v5e this is still correct, just f32-emulated).
                h = jnp.maximum(acc.astype(compute_dtype) + b_ref[...], 0)
            else:
                # Last layer (Identity): f32 bias-add, then one cast at the store.
                o_ref[...] = (acc + b_ref[...]).astype(o_ref.dtype)

    return kernel


def _pick_tm(M: int, tm):
    if tm is not None:
        return max(SUBLANE, _round_up(min(tm, _round_up(M, SUBLANE)), SUBLANE))
    # Split the batch into (at most) 2 tiles: keeps both v7x TensorCores busy via
    # the "parallel" grid axis, and caps single-TC (v5e/v6e) per-step overhead at
    # 2 grid steps.  Cap the tile so very large M still fits VMEM comfortably.
    t = _round_up(pl.cdiv(M, 2), SUBLANE)
    return max(SUBLANE, min(t, MAX_TM))


def ffn_forward(params, *args, tm=None,
                compute_dtype=jnp.bfloat16, out_dtype=jnp.float32):
    """Equivalent of FFN.forward(*args) — single fused Pallas call.

    params        : list of (W, b) with W shaped (out, in) like nn.Linear.
    args          : input parts; last-dim sizes must sum to params[0][0].shape[1].
    tm            : batch-tile rows (multiple of 8); None -> auto (<=2 tiles, <=2048 rows).
    compute_dtype : MXU operand dtype (bf16 default = native fast path; f32 for exact).
    out_dtype     : dtype of the returned array (bf16 halves writeback further).
    """
    n_layers = len(params)
    part_dims = [int(a.shape[-1]) for a in args]
    K0 = sum(part_dims)
    M = int(args[0].shape[0])

    out_dims = [int(w.shape[0]) for (w, _) in params]
    N = out_dims[-1]
    # Hidden widths padded to 128 lanes (zero pad => numerics unchanged);
    # last layer kept at true N so the output store/DMA is small.
    widths = [_round_up(d, LANE) for d in out_dims[:-1]] + [N]

    w0, _ = params[0]
    assert int(w0.shape[1]) == K0, (w0.shape, part_dims)

    # ---- pack padded, transposed weights -----------------------------------
    packed = []
    in_w = K0
    for j in range(n_layers):
        w, b = params[j]
        last = j == n_layers - 1
        w_t = w.T.astype(compute_dtype)                       # (in, out)
        packed.append(_pad2d(w_t, (in_w, widths[j])))
        b_dtype = jnp.float32 if last else compute_dtype       # f32 epilogue on last layer
        packed.append(_pad2d(b.astype(b_dtype).reshape(1, -1), (1, widths[j])))
        in_w = widths[j]

    # ---- pack input: concat parts + cast + batch pad in one wrapper copy ---
    tm_eff = _pick_tm(M, tm)
    m_pad = _round_up(M, tm_eff)
    x = jnp.concatenate([a.astype(compute_dtype) for a in args], axis=-1)
    x = _pad2d(x, (m_pad, K0))
    grid = (m_pad // tm_eff,)

    in_specs = [pl.BlockSpec((tm_eff, K0), lambda i: (i, 0))]
    # Weights/biases: full-array blocks with a constant block index -> stay
    # VMEM-resident across grid steps (no re-DMA).
    in_specs += [pl.BlockSpec(arr.shape, lambda i: (0, 0)) for arr in packed]
    out_spec = pl.BlockSpec((tm_eff, N), lambda i: (i, 0))      # true-N writeback

    # ---- cost estimate + VMEM budget ----------------------------------------
    flops = 0
    in_w = K0
    for j in range(n_layers):
        flops += 2 * m_pad * in_w * widths[j]
        in_w = widths[j]
    itemsize = jnp.dtype(compute_dtype).itemsize
    wb_bytes = sum(int(a.size) * a.dtype.itemsize for a in packed)
    io_bytes = (m_pad * K0 * itemsize) + (m_pad * N * jnp.dtype(out_dtype).itemsize)
    cost = pl.CostEstimate(flops=flops, transcendentals=0,
                           bytes_accessed=wb_bytes + io_bytes)

    max_w = max(widths + [_round_up(K0, LANE)])
    vmem_est = (2 * tm_eff * _round_up(K0, LANE) * itemsize          # input dbl-buffer
                + 2 * tm_eff * _round_up(N, LANE) * jnp.dtype(out_dtype).itemsize
                + 2 * wb_bytes                                       # resident weights (x2 slack)
                + 4 * tm_eff * max_w * 4)                            # live f32 intermediates
    vmem_limit = int(min(60 << 20, max(2 * vmem_est, 16 << 20)))     # stay under v7x 64 MiB

    kernel = _make_ffn_kernel(n_layers, compute_dtype)
    y_pad = pl.pallas_call(
        kernel,
        out_shape=jax.ShapeDtypeStruct((m_pad, N), out_dtype),
        grid=grid,
        in_specs=in_specs,
        out_specs=out_spec,
        compiler_params=pltpu.CompilerParams(
            dimension_semantics=("parallel",),   # v7x: shard batch tiles over 2 TCs
            vmem_limit_bytes=vmem_limit,
        ),
        cost_estimate=cost,
    )(x, *packed)

    return y_pad[:M] if m_pad != M else y_pad


def init_ffn_params(key, sizes):
    """Deterministic init mirroring nn.Linear defaults: U(-1/sqrt(fan_in), +)."""
    params = []
    for j in range(1, len(sizes)):
        fan_in, fan_out = sizes[j - 1], sizes[j]
        key, kw, kb = jax.random.split(key, 3)
        bound = 1.0 / jnp.sqrt(jnp.float32(fan_in))
        w = jax.random.uniform(kw, (fan_out, fan_in), jnp.float32, -bound, bound)
        b = jax.random.uniform(kb, (fan_out,), jnp.float32, -bound, bound)
        params.append((w, b))
    return params


def ffn_reference(params, *args):
    """Pure-JAX reference for correctness checking."""
    x = jnp.concatenate(args, axis=-1)
    n_layers = len(params)
    for j, (w, b) in enumerate(params):
        x = x @ w.T + b
        if j < n_layers - 1:
            x = jnp.maximum(x, 0.0)
    return x


if __name__ == "__main__":
    key = jax.random.PRNGKey(0)
    k_in1, k_in2, k_params, k_big1, k_big2 = jax.random.split(key, 5)

    # FFN(sizes=[12, 32, 16, 3]): concat of (batch,4) and (batch,8) -> 12 inputs,
    # hidden layers 32 and 16 with ReLU, output layer 3 with Identity.
    sizes = [12, 32, 16, 3]
    params = init_ffn_params(k_params, sizes)

    # --- small case, exact f32 path -----------------------------------------
    batch = 2
    x1 = jax.random.normal(k_in1, (batch, 4), jnp.float32)
    x2 = jax.random.normal(k_in2, (batch, 8), jnp.float32)

    out = jax.block_until_ready(ffn_forward(params, x1, x2, compute_dtype=jnp.float32))
    ref = ffn_reference(params, x1, x2)
    assert out.shape == (batch, sizes[-1]), out.shape
    assert jnp.allclose(out, ref, atol=1e-5, rtol=1e-5), "small-batch f32 mismatch"

    # --- large batch, exact f32 path: exercises batch tiling (grid > 1) -----
    big = 2048
    y1 = jax.random.normal(k_big1, (big, 4), jnp.float32)
    y2 = jax.random.normal(k_big2, (big, 8), jnp.float32)

    out_big = jax.block_until_ready(ffn_forward(params, y1, y2, compute_dtype=jnp.float32))
    ref_big = ffn_reference(params, y1, y2)
    assert out_big.shape == (big, sizes[-1]), out_big.shape
    assert jnp.allclose(out_big, ref_big, atol=1e-4, rtol=1e-4), "big-batch f32 mismatch"

    # --- default bf16 fast path (bf16 operands/inputs, f32 MXU accumulate) --
    out_bf16 = jax.block_until_ready(ffn_forward(params, y1, y2))
    assert out_bf16.shape == (big, sizes[-1]), out_bf16.shape
    assert jnp.allclose(out_bf16, ref_big, atol=5e-2, rtol=5e-2), "bf16 mismatch"

    # --- explicit tm (forces a different grid) covers the tm override path --
    out_tm = jax.block_until_ready(ffn_forward(params, y1, y2, tm=512,
                                               compute_dtype=jnp.float32))
    assert jnp.allclose(out_tm, ref_big, atol=1e-4, rtol=1e-4), "tm=512 mismatch"

    print("KERNEL_OK")
</pallas_src>

<mosaic_0001>
module attributes {stable_mosaic.version = 11 : i64} {
  func.func @kernel(%arg0: i32, %arg1: memref<8x12xf32, #tpu.memory_space<vmem>>, %arg2: memref<12x128xf32, #tpu.memory_space<vmem>>, %arg3: memref<1x128xf32, #tpu.memory_space<vmem>>, %arg4: memref<128x128xf32, #tpu.memory_space<vmem>>, %arg5: memref<1x128xf32, #tpu.memory_space<vmem>>, %arg6: memref<128x3xf32, #tpu.memory_space<vmem>>, %arg7: memref<1x3xf32, #tpu.memory_space<vmem>>, %arg8: memref<8x3xf32, #tpu.memory_space<vmem>>) attributes {dimension_semantics = [#tpu.dimension_semantics<parallel>], iteration_bounds = array<i64: 1>, scalar_prefetch = 0 : i64, scratch_operands = 0 : i64, tpu.core_type = #tpu.core_type<tc>, window_params = [{transform_indices = @transform_0, window_bounds = array<i64: 8, 12>}, {pipeline_mode = #tpu.pipeline_mode<synchronous>, transform_indices = @transform_1, window_bounds = array<i64: 12, 128>}, {pipeline_mode = #tpu.pipeline_mode<synchronous>, transform_indices = @transform_2, window_bounds = array<i64: 1, 128>}, {pipeline_mode = #tpu.pipeline_mode<synchronous>, transform_indices = @transform_3, window_bounds = array<i64: 128, 128>}, {pipeline_mode = #tpu.pipeline_mode<synchronous>, transform_indices = @transform_4, window_bounds = array<i64: 1, 128>}, {pipeline_mode = #tpu.pipeline_mode<synchronous>, transform_indices = @transform_5, window_bounds = array<i64: 128, 3>}, {pipeline_mode = #tpu.pipeline_mode<synchronous>, transform_indices = @transform_6, window_bounds = array<i64: 1, 3>}, {transform_indices = @transform_7, window_bounds = array<i64: 8, 3>}]} {
    %c0 = arith.constant 0 : index
    %c0_0 = arith.constant 0 : index
    %0 = vector.load %arg1[%c0, %c0_0] : memref<8x12xf32, #tpu.memory_space<vmem>>, vector<8x12xf32>
    %c0_1 = arith.constant 0 : index
    %c0_2 = arith.constant 0 : index
    %1 = vector.load %arg2[%c0_1, %c0_2] : memref<12x128xf32, #tpu.memory_space<vmem>>, vector<12x128xf32>
    %cst = arith.constant dense<0.000000e+00> : vector<8x128xf32>
    %2 = tpu.matmul %0, %1, %cst {dimension_numbers = #tpu.dot_dimension_numbers<[1], [0], [0], [1], [0, 0, 1, 1], [], []>} : vector<8x12xf32>, vector<12x128xf32>, vector<8x128xf32> -> vector<8x128xf32>
    %c0_3 = arith.constant 0 : index
    %c0_4 = arith.constant 0 : index
    %3 = vector.load %arg3[%c0_3, %c0_4] : memref<1x128xf32, #tpu.memory_space<vmem>>, vector<1x128xf32>
    %4 = vector.broadcast %3 : vector<1x128xf32> to vector<8x128xf32>
    %5 = arith.addf %2, %4 : vector<8x128xf32>
    %cst_5 = arith.constant 0.000000e+00 : f32
    %6 = vector.broadcast %cst_5 : f32 to vector<8x128xf32>
    %7 = arith.maximumf %5, %6 : vector<8x128xf32>
    %c0_6 = arith.constant 0 : index
    %c0_7 = arith.constant 0 : index
    %8 = vector.load %arg4[%c0_6, %c0_7] : memref<128x128xf32, #tpu.memory_space<vmem>>, vector<128x128xf32>
    %cst_8 = arith.constant dense<0.000000e+00> : vector<8x128xf32>
    %9 = tpu.matmul %7, %8, %cst_8 {dimension_numbers = #tpu.dot_dimension_numbers<[1], [0], [0], [1], [0, 0, 1, 1], [], []>} : vector<8x128xf32>, vector<128x128xf32>, vector<8x128xf32> -> vector<8x128xf32>
    %c0_9 = arith.constant 0 : index
    %c0_10 = arith.constant 0 : index
    %10 = vector.load %arg5[%c0_9, %c0_10] : memref<1x128xf32, #tpu.memory_space<vmem>>, vector<1x128xf32>
    %11 = vector.broadcast %10 : vector<1x128xf32> to vector<8x128xf32>
    %12 = arith.addf %9, %11 : vector<8x128xf32>
    %cst_11 = arith.constant 0.000000e+00 : f32
    %13 = vector.broadcast %cst_11 : f32 to vector<8x128xf32>
    %14 = arith.maximumf %12, %13 : vector<8x128xf32>
    %c0_12 = arith.constant 0 : index
    %c0_13 = arith.constant 0 : index
    %15 = vector.load %arg6[%c0_12, %c0_13] : memref<128x3xf32, #tpu.memory_space<vmem>>, vector<128x3xf32>
    %cst_14 = arith.constant dense<0.000000e+00> : vector<8x3xf32>
    %16 = tpu.matmul %14, %15, %cst_14 {dimension_numbers = #tpu.dot_dimension_numbers<[1], [0], [0], [1], [0, 0, 1, 1], [], []>} : vector<8x128xf32>, vector<128x3xf32>, vector<8x3xf32> -> vector<8x3xf32>
    %c0_15 = arith.constant 0 : index
    %c0_16 = arith.constant 0 : index
    %17 = vector.load %arg7[%c0_15, %c0_16] : memref<1x3xf32, #tpu.memory_space<vmem>>, vector<1x3xf32>
    %18 = vector.broadcast %17 : vector<1x3xf32> to vector<8x3xf32>
    %19 = arith.addf %16, %18 : vector<8x3xf32>
    %c0_17 = arith.constant 0 : index
    %c0_18 = arith.constant 0 : index
    %20 = vector.load %arg8[%c0_17, %c0_18] : memref<8x3xf32, #tpu.memory_space<vmem>>, vector<8x3xf32>
    tpu.vector_store %arg8[%c0_17, %c0_18], %19 {strides = array<i32>} : memref<8x3xf32, #tpu.memory_space<vmem>>, vector<8x3xf32>,
    return
  }
  func.func @transform_0(%arg0: i32) -> (i32, i32) {
    %c0_i32 = arith.constant 0 : i32
    %c0_i32_0 = arith.constant 0 : i32
    return %arg0, %c0_i32 : i32, i32
  }
  func.func @transform_1(%arg0: i32) -> (i32, i32) {
    %c0_i32 = arith.constant 0 : i32
    %c0_i32_0 = arith.constant 0 : i32
    %c0_i32_1 = arith.constant 0 : i32
    return %c0_i32, %c0_i32_0 : i32, i32
  }
  func.func @transform_2(%arg0: i32) -> (i32, i32) {
    %c0_i32 = arith.constant 0 : i32
    %c0_i32_0 = arith.constant 0 : i32
    %c0_i32_1 = arith.constant 0 : i32
    return %c0_i32, %c0_i32_0 : i32, i32
  }
  func.func @transform_3(%arg0: i32) -> (i32, i32) {
    %c0_i32 = arith.constant 0 : i32
    %c0_i32_0 = arith.constant 0 : i32
    %c0_i32_1 = arith.constant 0 : i32
    return %c0_i32, %c0_i32_0 : i32, i32
  }
  func.func @transform_4(%arg0: i32) -> (i32, i32) {
    %c0_i32 = arith.constant 0 : i32
    %c0_i32_0 = arith.constant 0 : i32
    %c0_i32_1 = arith.constant 0 : i32
    return %c0_i32, %c0_i32_0 : i32, i32
  }
  func.func @transform_5(%arg0: i32) -> (i32, i32) {
    %c0_i32 = arith.constant 0 : i32
    %c0_i32_0 = arith.constant 0 : i32
    %c0_i32_1 = arith.constant 0 : i32
    return %c0_i32, %c0_i32_0 : i32, i32
  }
  func.func @transform_6(%arg0: i32) -> (i32, i32) {
    %c0_i32 = arith.constant 0 : i32
    %c0_i32_0 = arith.constant 0 : i32
    %c0_i32_1 = arith.constant 0 : i32
    return %c0_i32, %c0_i32_0 : i32, i32
  }
  func.func @transform_7(%arg0: i32) -> (i32, i32) {
    %c0_i32 = arith.constant 0 : i32
    %c0_i32_0 = arith.constant 0 : i32
    return %arg0, %c0_i32 : i32, i32
  }
}

</mosaic_0001>

<llo_original>
// kernel: tpu_custom_call.1
$region0: #{tpu_custom_call.1}
  #allocation0 [shape = 'u32[]', space=smem, size = 0x4, offset = 0x4, fixed_abs, tag = 'smem constant byte address 0x4 - core index']
  #allocation1 [shape = 'u32[72,128]{1,0:T(1,128)}', space=vmem, size = 0x9000, scoped, tag = 'internal scratch']
  %s0 = inlined_call_operand.hbm [shape: f32[8,12], index: 0, kind: input, shape index: {}]
  %s1 = inlined_call_operand.hbm [shape: f32[12,128], index: 1, kind: input, shape index: {}]
  %s2 = inlined_call_operand.vmem [shape: f32[1,128], index: 2, kind: input, shape index: {}]
  %s3 = inlined_call_operand.vmem [shape: f32[128,128], index: 3, kind: input, shape index: {}]
  %s4 = inlined_call_operand.vmem [shape: f32[1,128], index: 4, kind: input, shape index: {}]
  %s5 = inlined_call_operand.vmem [shape: f32[128,3], index: 5, kind: input, shape index: {}]
  %s6 = inlined_call_operand.vmem [shape: f32[1,3], index: 6, kind: input, shape index: {}]
  %s7 = inlined_call_operand.vmem [shape: f32[8,3], index: 7, kind: output, shape index: {}]
  %s8 = sld [smem:[#allocation0]]
  $region46: #{tpu_custom_call.1} parent=0
    _
  %s10 = ssub.s32 1, %s8
  %s11 = scalar_select 0, %s10, %s8
  $region1: #{tpu_custom_call.1} parent=0
    #allocation2 [shape = 'u8[4096]{0}', space=vmem, size = 0x1000, scoped, tag = 'input window, operand 0, single buffered']
    #allocation3 [shape = 's32[1]{0}', space=sflag, size = 0x4, scoped, tag = 'scoped memory for tpu_custom_call.1']
    #allocation4 [shape = 'u8[8192]{0}', space=vmem, size = 0x2000, scoped, tag = 'input window, operand 1, single buffered']
    #allocation5 [shape = 's32[1]{0}', space=sflag, size = 0x4, scoped, tag = 'scoped memory for tpu_custom_call.1']
    %12 = vsyncpa [#allocation3], 0
    %13 = vsyncpa [#allocation5], 0
    // Predicated region
    $region2: #{tpu_custom_call.1} parent=1 // pred_check
      _
    $region3: #{tpu_custom_call.1} parent=1 // pred_check_branch
      %15 = sbr.rel (0) target = $region5
    $region4: #{tpu_custom_call.1} parent=1 // pred_region
      %17 = vsyncadd [#allocation3], 0
      %s19 = sshll.u32 %s0, 4
      %s20 = int_to_ptr.hbm [resolvable:$true] %s19
      %s21 = sshll.u32 [#allocation2], 4
      %s22 = int_to_ptr.vmem [resolvable:$true] %s21
      %24 = dma.hbm_to_vmem [thread:$0]  %s20, 128, %s22, [#allocation3]
    $region5: #{tpu_custom_call.1} parent=1 // pred_fallthru
      _
    // Predicated region
    $region6: #{tpu_custom_call.1} parent=1 // pred_check
      _
    $region7: #{tpu_custom_call.1} parent=1 // pred_check_branch
      %26 = sbr.rel (0) target = $region9
    $region8: #{tpu_custom_call.1} parent=1 // pred_region
      %28 = vsyncadd [#allocation5], 0
      %s29 = sshll.u32 %s1, 4
      %s30 = int_to_ptr.hbm [resolvable:$true] %s29
      %s31 = sshll.u32 [#allocation4], 4
      %s32 = int_to_ptr.vmem [resolvable:$true] %s31
      %37 = dma.hbm_to_vmem [thread:$0]  %s30, 256, %s32, [#allocation5], 128, 128, 8
    $region9: #{tpu_custom_call.1} parent=1 // pred_fallthru
      _
    // Predicated region
    $region10: #{tpu_custom_call.1} parent=1 // pred_check
      _
    $region11: #{tpu_custom_call.1} parent=1 // pred_check_branch
      %39 = sbr.rel (0) target = $region13
    $region12: #{tpu_custom_call.1} parent=1 // pred_region
      _
    $region13: #{tpu_custom_call.1} parent=1 // pred_fallthru
      _
    // Predicated region
    $region14: #{tpu_custom_call.1} parent=1 // pred_check
      _
    $region15: #{tpu_custom_call.1} parent=1 // pred_check_branch
      %41 = sbr.rel (0) target = $region17
    $region16: #{tpu_custom_call.1} parent=1 // pred_region
      _
    $region17: #{tpu_custom_call.1} parent=1 // pred_fallthru
      _
    // Predicated region
    $region18: #{tpu_custom_call.1} parent=1 // pred_check
      _
    $region19: #{tpu_custom_call.1} parent=1 // pred_check_branch
      %43 = sbr.rel (0) target = $region21
    $region20: #{tpu_custom_call.1} parent=1 // pred_region
      _
    $region21: #{tpu_custom_call.1} parent=1 // pred_fallthru
      _
    // Predicated region
    $region22: #{tpu_custom_call.1} parent=1 // pred_check
      _
    $region23: #{tpu_custom_call.1} parent=1 // pred_check_branch
      %45 = sbr.rel (0) target = $region25
    $region24: #{tpu_custom_call.1} parent=1 // pred_region
      _
    $region25: #{tpu_custom_call.1} parent=1 // pred_fallthru
      _
    // Predicated region
    $region26: #{tpu_custom_call.1} parent=1 // pred_check
      _
    $region27: #{tpu_custom_call.1} parent=1 // pred_check_branch
      %47 = sbr.rel (0) target = $region29
    $region28: #{tpu_custom_call.1} parent=1 // pred_region
      _
    $region29: #{tpu_custom_call.1} parent=1 // pred_fallthru
      _
    // Predicated region
    $region30: #{tpu_custom_call.1} parent=1 // pred_check
      _
    $region31: #{tpu_custom_call.1} parent=1 // pred_check_branch
      %49 = sbr.rel (0) target = $region33
    $region32: #{tpu_custom_call.1} parent=1 // pred_region
      %51 = dma.done [#allocation3], 128
    $region33: #{tpu_custom_call.1} parent=1 // pred_fallthru
      _
    // Predicated region
    $region34: #{tpu_custom_call.1} parent=1 // pred_check
      _
    $region35: #{tpu_custom_call.1} parent=1 // pred_check_branch
      %53 = sbr.rel (0) target = $region37
    $region36: #{tpu_custom_call.1} parent=1 // pred_region
      %55 = dma.done [#allocation5], 256
    $region37: #{tpu_custom_call.1} parent=1 // pred_fallthru
      _
    %v56 = vld [vmem:[#allocation2] sm:$0xff]
    %v57 = vld [vmem:[#allocation4] sm:$0xff]
    %v58 = vld [vmem:[#allocation4 + $0x8] sm:$0xf]
    %v59 = vld [vmem:[%s2] sm:$0x1]
    %v61 = vperm.slane %v59, 0
    %vm63 = vcmask 97280
    %v65 = vsel %vm63, %v56, 0
    %vm67 = vcmask 1043456
    %v69 = vsel %vm67, %v58, 0
    %71 = vmatpush.msra.mxu0 0.0
    %72 = vmatpush.msra.mxu0 0.0
    %73 = vmatpush.msra.mxu0 0.0
    %74 = vmatpush.msra.mxu0 0.0
    %75 = vmatpush.msra.mxu0 0.0
    %76 = vmatpush.msra.mxu0 0.0
    %77 = vmatpush.msra.mxu0 0.0
    %78 = vmatpush.msra.mxu0 0.0
    %79 = vmatpush.msra.mxu0 0.0
    %80 = vmatpush.msra.mxu0 0.0
    %81 = vmatpush.msra.mxu0 0.0
    %82 = vmatpush.msra.mxu0 0.0
    %83 = vmatpush.msra.mxu0 0.0
    %84 = vmatpush.msra.mxu0 0.0
    %85 = vmatpush.msra.mxu0 %v69
    %86 = vmatpush.msra.mxu0 %v57
    %87 = vmatmul.f32.gmra.mxu0 %v65
    %v88 = vpop.f32.mrf.mxu0
    %v89 = vadd.f32 %v61, %v88
    %90 = vdwg.mxu0
    %v91 = vmax.f32 %v89, 0.0
    %v92 = vld [vmem:[%s3] sm:$0xff]
    %v93 = vld [vmem:[%s3 + $0x8] sm:$0xff]
    %v94 = vld [vmem:[%s3 + $0x10] sm:$0xff]
    %v95 = vld [vmem:[%s3 + $0x18] sm:$0xff]
    %v96 = vld [vmem:[%s3 + $0x20] sm:$0xff]
    %v97 = vld [vmem:[%s3 + $0x28] sm:$0xff]
    %v98 = vld [vmem:[%s3 + $0x30] sm:$0xff]
    %v99 = vld [vmem:[%s3 + $0x38] sm:$0xff]
    %v100 = vld [vmem:[%s3 + $0x40] sm:$0xff]
    %v101 = vld [vmem:[%s3 + $0x48] sm:$0xff]
    %v102 = vld [vmem:[%s3 + $0x50] sm:$0xff]
    %v103 = vld [vmem:[%s3 + $0x58] sm:$0xff]
    %v104 = vld [vmem:[%s3 + $0x60] sm:$0xff]
    %v105 = vld [vmem:[%s3 + $0x68] sm:$0xff]
    %v106 = vld [vmem:[%s3 + $0x70] sm:$0xff]
    %v107 = vld [vmem:[%s3 + $0x78] sm:$0xff]
    %v108 = vld [vmem:[%s4] sm:$0x1]
    %v110 = vperm.slane %v108, 0
    %112 = vmatpush.msra.mxu0 %v107
    %113 = vmatpush.msra.mxu0 %v106
    %114 = vmatpush.msra.mxu0 %v105
    %115 = vmatpush.msra.mxu0 %v104
    %116 = vmatpush.msra.mxu0 %v103
    %117 = vmatpush.msra.mxu0 %v102
    %118 = vmatpush.msra.mxu0 %v101
    %119 = vmatpush.msra.mxu0 %v100
    %120 = vmatpush.msra.mxu0 %v99
    %121 = vmatpush.msra.mxu0 %v98
    %122 = vmatpush.msra.mxu0 %v97
    %123 = vmatpush.msra.mxu0 %v96
    %124 = vmatpush.msra.mxu0 %v95
    %125 = vmatpush.msra.mxu0 %v94
    %126 = vmatpush.msra.mxu0 %v93
    %127 = vmatpush.msra.mxu0 %v92
    %128 = vmatmul.f32.gmra.mxu0 %v91
    %v129 = vpop.f32.mrf.mxu0
    %v130 = vadd.f32 %v110, %v129
    %131 = vdwg.mxu0
    %v132 = vmax.f32 %v130, 0.0
    %v133 = vld [vmem:[%s5] sm:$0xff]
    %v134 = vld [vmem:[%s5 + $0x8] sm:$0xff]
    %v135 = vld [vmem:[%s5 + $0x10] sm:$0xff]
    %v136 = vld [vmem:[%s5 + $0x18] sm:$0xff]
    %v137 = vld [vmem:[%s5 + $0x20] sm:$0xff]
    %v138 = vld [vmem:[%s5 + $0x28] sm:$0xff]
    %v139 = vld [vmem:[%s5 + $0x30] sm:$0xff]
    %v140 = vld [vmem:[%s5 + $0x38] sm:$0xff]
    %v141 = vld [vmem:[%s5 + $0x40] sm:$0xff]
    %v142 = vld [vmem:[%s5 + $0x48] sm:$0xff]
    %v143 = vld [vmem:[%s5 + $0x50] sm:$0xff]
    %v144 = vld [vmem:[%s5 + $0x58] sm:$0xff]
    %v145 = vld [vmem:[%s5 + $0x60] sm:$0xff]
    %v146 = vld [vmem:[%s5 + $0x68] sm:$0xff]
    %v147 = vld [vmem:[%s5 + $0x70] sm:$0xff]
    %v148 = vld [vmem:[%s5 + $0x78] sm:$0xff]
    %v149 = vld [vmem:[%s6] sm:$0x1]
    %v151 = vperm.slane %v149, 0
    %153 = vmatpush.msra.mxu0 %v148
    %154 = vmatpush.msra.mxu0 %v147
    %155 = vmatpush.msra.mxu0 %v146
    %156 = vmatpush.msra.mxu0 %v145
    %157 = vmatpush.msra.mxu0 %v144
    %158 = vmatpush.msra.mxu0 %v143
    %159 = vmatpush.msra.mxu0 %v142
    %160 = vmatpush.msra.mxu0 %v141
    %161 = vmatpush.msra.mxu0 %v140
    %162 = vmatpush.msra.mxu0 %v139
    %163 = vmatpush.msra.mxu0 %v138
    %164 = vmatpush.msra.mxu0 %v137
    %165 = vmatpush.msra.mxu0 %v136
    %166 = vmatpush.msra.mxu0 %v135
    %167 = vmatpush.msra.mxu0 %v134
    %168 = vmatpush.msra.mxu0 %v133
    %169 = vmatmul.f32.gmra.mxu0 %v132
    %v170 = vpop.f32.mrf.mxu0
    %v171 = vadd.f32 %v151, %v170
    %172 = vdwg.mxu0
    %vm173 = vcmask 23552
    %174 = vst.msk [vmem:[%s7] sm:$0xff] %vm173, %v171
    // Predicated region
    $region38: #{tpu_custom_call.1} parent=1 // pred_check
      _
    $region39: #{tpu_custom_call.1} parent=1 // pred_check_branch
      %176 = sbr.rel (0) target = $region41
    $region40: #{tpu_custom_call.1} parent=1 // pred_region
      _
    $region41: #{tpu_custom_call.1} parent=1 // pred_fallthru
      _
    // Predicated region
    $region42: #{tpu_custom_call.1} parent=1 // pred_check
      _
    $region43: #{tpu_custom_call.1} parent=1 // pred_check_branch
      %178 = sbr.rel (0) target = $region45
    $region44: #{tpu_custom_call.1} parent=1 // pred_region
      _
    $region45: #{tpu_custom_call.1} parent=1 // pred_fallthru
      _
    %179 = vsyncpa [#allocation3], 1
    %180 = vsyncpa [#allocation5], 1

</llo_original>
